<compile_context>
chip_gen: v7x
topology: tpu7x:2x2x1
jax: 0.10.0
libtpu: 0.0.40
codegen_flags: <defaults>
</compile_context>

<pallas_src>
import math
import jax
import jax.numpy as jnp
from jax.experimental import pallas as pl
from jax.experimental.pallas import tpu as pltpu


def _round_up(n, m):
    return ((n + m - 1) // m) * m


def mlp_kernel(x_ref, w1_ref, b1_ref, w2_ref, b2_ref, w3t_ref, b3t_ref, ot_ref):
    # Layer 1: Linear + ReLU (f32 MXU matmul, f32 accumulate).
    h = jnp.dot(x_ref[...], w1_ref[...], preferred_element_type=jnp.float32)
    h = jnp.maximum(h + b1_ref[...], 0.0)
    # Layer 2: Linear + ReLU.
    h = jnp.dot(h, w2_ref[...], preferred_element_type=jnp.float32)
    h = jnp.maximum(h + b2_ref[...], 0.0)
    # Output layer, computed transposed so the store is lane-dense:
    #   out_t[o, b] = sum_k w3t[o, k] * h[b, k]    (A @ B^T on the MXU)
    out_t = jax.lax.dot_general(
        w3t_ref[...], h,
        dimension_numbers=(((1,), (1,)), ((), ())),
        preferred_element_type=jnp.float32)
    ot_ref[...] = (out_t + b3t_ref[...]).astype(ot_ref.dtype)


def mlp_forward(x, w1, b1, w2, b2, w3, b3, *, tb_max=2048, min_tiles=2):
    B, in_dim = x.shape
    h1 = w1.shape[1]
    h2 = w2.shape[1]
    out_n = w3.shape[1]

    # Tiny (KB-scale) parameter reshapes so the final layer is computed transposed.
    w3t = jnp.transpose(w3)              # (out_n, h2)
    b3t = jnp.reshape(b3, (out_n, 1))    # (out_n, 1), broadcasts across lanes

    xf = x.astype(jnp.float32)           # no-op for f32 inputs

    # --- batch tile selection ---
    if B <= 256:
        # Single block covering the whole array: full-dim blocks carry no
        # (8,128) alignment requirement and need no padding at all.
        tb = B
    else:
        # >= min_tiles grid steps so v7x's two TensorCores both get work;
        # tb is a multiple of 128 so the (out_n, tb) output tiles stay lane-dense.
        n_tiles = max(pl.cdiv(B, tb_max), min_tiles)
        tb = _round_up(pl.cdiv(B, n_tiles), 128)
    # Ragged last tile (when tb does not divide B) is clipped by Pallas:
    # out-of-range input rows are undefined, out-of-range output lanes dropped.
    grid = (pl.cdiv(B, tb),)

    def full_spec(arr):
        return pl.BlockSpec(arr.shape, lambda i: (0, 0))

    flops = 2 * B * (in_dim * h1 + h1 * h2 + h2 * out_n)
    bytes_accessed = (
        B * in_dim * 4                                   # x (f32)
        + B * out_n * 4                                  # output (f32, slim)
        + (in_dim * h1 + h1 * h2 + h2 * out_n) * 4       # weights
        + (h1 + h2 + out_n) * 4                          # biases
    )

    out_t = pl.pallas_call(
        mlp_kernel,
        out_shape=jax.ShapeDtypeStruct((out_n, B), jnp.float32),
        grid_spec=pltpu.PrefetchScalarGridSpec(
            num_scalar_prefetch=0,
            grid=grid,
            in_specs=[
                pl.BlockSpec((tb, in_dim), lambda i: (i, 0)),   # x batch tile
                full_spec(w1), full_spec(b1),
                full_spec(w2), full_spec(b2),
                full_spec(w3t), full_spec(b3t),
            ],
            out_specs=pl.BlockSpec((out_n, tb), lambda i: (0, i)),
        ),
        compiler_params=pltpu.CompilerParams(
            dimension_semantics=("parallel",)),
        cost_estimate=pl.CostEstimate(
            flops=flops, transcendentals=0, bytes_accessed=bytes_accessed),
    )(xf, w1, b1, w2, b2, w3t, b3t)

    # (out_n, B) -> (B, out_n): tiny (32 B/row) compared to the old padded slice.
    return jnp.transpose(out_t).astype(x.dtype)


def init_linear(key, fan_in, fan_out, dtype=jnp.float32):
    # Deterministic init mimicking torch.nn.Linear default: U(-1/sqrt(fan_in), +).
    kw, kb = jax.random.split(key)
    bound = 1.0 / math.sqrt(fan_in)
    # Stored as (in, out) so the kernel computes x @ W.
    w = jax.random.uniform(kw, (fan_in, fan_out), dtype, -bound, bound)
    b = jax.random.uniform(kb, (1, fan_out), dtype, -bound, bound)
    return w, b


if __name__ == "__main__":
    input_neurons = 32
    hidden = [64, 64]
    output_neurons = 8

    key = jax.random.PRNGKey(0)
    kx, k1, k2, k3, kx2 = jax.random.split(key, 5)

    w1, b1 = init_linear(k1, input_neurons, hidden[0])
    w2, b2 = init_linear(k2, hidden[0], hidden[1])
    w3, b3 = init_linear(k3, hidden[1], output_neurons)

    def ref_fwd(x):
        r = jnp.maximum(x @ w1 + b1, 0.0)
        r = jnp.maximum(r @ w2 + b2, 0.0)
        return r @ w3 + b3

    # Small batch: single full-array block path (no padding, no alignment).
    x_small = jax.random.normal(kx, (8, input_neurons), jnp.float32)
    out_small = jax.block_until_ready(
        mlp_forward(x_small, w1, b1, w2, b2, w3, b3))
    ref_small = ref_fwd(x_small)
    assert out_small.shape == (8, output_neurons)
    assert jnp.allclose(out_small, ref_small, atol=2e-2, rtol=2e-2), (
        jnp.max(jnp.abs(out_small - ref_small)))

    # Larger non-tile-aligned batch: multi-tile path with a ragged last tile.
    x_big = jax.random.normal(kx2, (384, input_neurons), jnp.float32)
    out_big = jax.block_until_ready(
        mlp_forward(x_big, w1, b1, w2, b2, w3, b3))
    ref_big = ref_fwd(x_big)
    assert out_big.shape == (384, output_neurons)
    assert jnp.allclose(out_big, ref_big, atol=2e-2, rtol=2e-2), (
        jnp.max(jnp.abs(out_big - ref_big)))

    print("KERNEL_OK")
</pallas_src>

<mosaic_0001>
module attributes {stable_mosaic.version = 11 : i64} {
  func.func @mlp_kernel(%arg0: i32, %arg1: memref<8x32xf32, #tpu.memory_space<vmem>>, %arg2: memref<32x64xf32, #tpu.memory_space<vmem>>, %arg3: memref<1x64xf32, #tpu.memory_space<vmem>>, %arg4: memref<64x64xf32, #tpu.memory_space<vmem>>, %arg5: memref<1x64xf32, #tpu.memory_space<vmem>>, %arg6: memref<8x64xf32, #tpu.memory_space<vmem>>, %arg7: memref<8x1xf32, #tpu.memory_space<vmem>>, %arg8: memref<8x8xf32, #tpu.memory_space<vmem>>) attributes {dimension_semantics = [#tpu.dimension_semantics<parallel>], iteration_bounds = array<i64: 1>, scalar_prefetch = 0 : i64, scratch_operands = 0 : i64, tpu.core_type = #tpu.core_type<tc>, window_params = [{transform_indices = @transform_0, window_bounds = array<i64: 8, 32>}, {pipeline_mode = #tpu.pipeline_mode<synchronous>, transform_indices = @transform_1, window_bounds = array<i64: 32, 64>}, {pipeline_mode = #tpu.pipeline_mode<synchronous>, transform_indices = @transform_2, window_bounds = array<i64: 1, 64>}, {pipeline_mode = #tpu.pipeline_mode<synchronous>, transform_indices = @transform_3, window_bounds = array<i64: 64, 64>}, {pipeline_mode = #tpu.pipeline_mode<synchronous>, transform_indices = @transform_4, window_bounds = array<i64: 1, 64>}, {pipeline_mode = #tpu.pipeline_mode<synchronous>, transform_indices = @transform_5, window_bounds = array<i64: 8, 64>}, {pipeline_mode = #tpu.pipeline_mode<synchronous>, transform_indices = @transform_6, window_bounds = array<i64: 8, 1>}, {transform_indices = @transform_7, window_bounds = array<i64: 8, 8>}]} {
    %c0 = arith.constant 0 : index
    %c0_0 = arith.constant 0 : index
    %0 = vector.load %arg1[%c0, %c0_0] : memref<8x32xf32, #tpu.memory_space<vmem>>, vector<8x32xf32>
    %c0_1 = arith.constant 0 : index
    %c0_2 = arith.constant 0 : index
    %1 = vector.load %arg2[%c0_1, %c0_2] : memref<32x64xf32, #tpu.memory_space<vmem>>, vector<32x64xf32>
    %cst = arith.constant dense<0.000000e+00> : vector<8x64xf32>
    %2 = tpu.matmul %0, %1, %cst {dimension_numbers = #tpu.dot_dimension_numbers<[1], [0], [0], [1], [0, 0, 1, 1], [], []>} : vector<8x32xf32>, vector<32x64xf32>, vector<8x64xf32> -> vector<8x64xf32>
    %c0_3 = arith.constant 0 : index
    %c0_4 = arith.constant 0 : index
    %3 = vector.load %arg3[%c0_3, %c0_4] : memref<1x64xf32, #tpu.memory_space<vmem>>, vector<1x64xf32>
    %4 = vector.broadcast %3 : vector<1x64xf32> to vector<8x64xf32>
    %5 = arith.addf %2, %4 : vector<8x64xf32>
    %cst_5 = arith.constant 0.000000e+00 : f32
    %6 = vector.broadcast %cst_5 : f32 to vector<8x64xf32>
    %7 = arith.maximumf %5, %6 : vector<8x64xf32>
    %c0_6 = arith.constant 0 : index
    %c0_7 = arith.constant 0 : index
    %8 = vector.load %arg4[%c0_6, %c0_7] : memref<64x64xf32, #tpu.memory_space<vmem>>, vector<64x64xf32>
    %cst_8 = arith.constant dense<0.000000e+00> : vector<8x64xf32>
    %9 = tpu.matmul %7, %8, %cst_8 {dimension_numbers = #tpu.dot_dimension_numbers<[1], [0], [0], [1], [0, 0, 1, 1], [], []>} : vector<8x64xf32>, vector<64x64xf32>, vector<8x64xf32> -> vector<8x64xf32>
    %c0_9 = arith.constant 0 : index
    %c0_10 = arith.constant 0 : index
    %10 = vector.load %arg5[%c0_9, %c0_10] : memref<1x64xf32, #tpu.memory_space<vmem>>, vector<1x64xf32>
    %11 = vector.broadcast %10 : vector<1x64xf32> to vector<8x64xf32>
    %12 = arith.addf %9, %11 : vector<8x64xf32>
    %cst_11 = arith.constant 0.000000e+00 : f32
    %13 = vector.broadcast %cst_11 : f32 to vector<8x64xf32>
    %14 = arith.maximumf %12, %13 : vector<8x64xf32>
    %c0_12 = arith.constant 0 : index
    %c0_13 = arith.constant 0 : index
    %15 = vector.load %arg6[%c0_12, %c0_13] : memref<8x64xf32, #tpu.memory_space<vmem>>, vector<8x64xf32>
    %cst_14 = arith.constant dense<0.000000e+00> : vector<8x8xf32>
    %16 = tpu.matmul %15, %14, %cst_14 {dimension_numbers = #tpu.dot_dimension_numbers<[1], [1], [0], [0], [0, 0, 1, 0], [], []>} : vector<8x64xf32>, vector<8x64xf32>, vector<8x8xf32> -> vector<8x8xf32>
    %c0_15 = arith.constant 0 : index
    %c0_16 = arith.constant 0 : index
    %17 = vector.load %arg7[%c0_15, %c0_16] : memref<8x1xf32, #tpu.memory_space<vmem>>, vector<8x1xf32>
    %18 = vector.broadcast %17 : vector<8x1xf32> to vector<8x8xf32>
    %19 = arith.addf %16, %18 : vector<8x8xf32>
    %c0_17 = arith.constant 0 : index
    %c0_18 = arith.constant 0 : index
    %20 = vector.load %arg8[%c0_17, %c0_18] : memref<8x8xf32, #tpu.memory_space<vmem>>, vector<8x8xf32>
    tpu.vector_store %arg8[%c0_17, %c0_18], %19 {strides = array<i32>} : memref<8x8xf32, #tpu.memory_space<vmem>>, vector<8x8xf32>,
    return
  }
  func.func @transform_0(%arg0: i32) -> (i32, i32) {
    %c0_i32 = arith.constant 0 : i32
    %c0_i32_0 = arith.constant 0 : i32
    return %arg0, %c0_i32 : i32, i32
  }
  func.func @transform_1(%arg0: i32) -> (i32, i32) {
    %c0_i32 = arith.constant 0 : i32
    %c0_i32_0 = arith.constant 0 : i32
    %c0_i32_1 = arith.constant 0 : i32
    return %c0_i32, %c0_i32_0 : i32, i32
  }
  func.func @transform_2(%arg0: i32) -> (i32, i32) {
    %c0_i32 = arith.constant 0 : i32
    %c0_i32_0 = arith.constant 0 : i32
    %c0_i32_1 = arith.constant 0 : i32
    return %c0_i32, %c0_i32_0 : i32, i32
  }
  func.func @transform_3(%arg0: i32) -> (i32, i32) {
    %c0_i32 = arith.constant 0 : i32
    %c0_i32_0 = arith.constant 0 : i32
    %c0_i32_1 = arith.constant 0 : i32
    return %c0_i32, %c0_i32_0 : i32, i32
  }
  func.func @transform_4(%arg0: i32) -> (i32, i32) {
    %c0_i32 = arith.constant 0 : i32
    %c0_i32_0 = arith.constant 0 : i32
    %c0_i32_1 = arith.constant 0 : i32
    return %c0_i32, %c0_i32_0 : i32, i32
  }
  func.func @transform_5(%arg0: i32) -> (i32, i32) {
    %c0_i32 = arith.constant 0 : i32
    %c0_i32_0 = arith.constant 0 : i32
    %c0_i32_1 = arith.constant 0 : i32
    return %c0_i32, %c0_i32_0 : i32, i32
  }
  func.func @transform_6(%arg0: i32) -> (i32, i32) {
    %c0_i32 = arith.constant 0 : i32
    %c0_i32_0 = arith.constant 0 : i32
    %c0_i32_1 = arith.constant 0 : i32
    return %c0_i32, %c0_i32_0 : i32, i32
  }
  func.func @transform_7(%arg0: i32) -> (i32, i32) {
    %c0_i32 = arith.constant 0 : i32
    %c0_i32_0 = arith.constant 0 : i32
    return %c0_i32, %arg0 : i32, i32
  }
}

</mosaic_0001>

<llo_original>
// kernel: tpu_custom_call.1
$region0: #{tpu_custom_call.1}
  #allocation0 [shape = 'u32[]', space=smem, size = 0x4, offset = 0x4, fixed_abs, tag = 'smem constant byte address 0x4 - core index']
  #allocation1 [shape = 'u32[144,128]{1,0:T(1,128)}', space=vmem, size = 0x12000, scoped, tag = 'internal scratch']
  %s0 = inlined_call_operand.vmem [shape: f32[8,32], index: 0, kind: input, shape index: {}]
  %s1 = inlined_call_operand.hbm [shape: f32[32,64], index: 1, kind: input, shape index: {}]
  %s2 = inlined_call_operand.hbm [shape: f32[1,64], index: 2, kind: input, shape index: {}]
  %s3 = inlined_call_operand.hbm [shape: f32[64,64], index: 3, kind: input, shape index: {}]
  %s4 = inlined_call_operand.vmem [shape: f32[1,64], index: 4, kind: input, shape index: {}]
  %s5 = inlined_call_operand.vmem [shape: f32[8,64], index: 5, kind: input, shape index: {}]
  %s6 = inlined_call_operand.vmem [shape: f32[8,1], index: 6, kind: input, shape index: {}]
  %s7 = inlined_call_operand.hbm [shape: f32[8,8], index: 7, kind: output, shape index: {}]
  %s8 = sld [smem:[#allocation0]]
  $region50: #{tpu_custom_call.1} parent=0
    _
  %s10 = ssub.s32 1, %s8
  %s11 = scalar_select 0, %s10, %s8
  $region1: #{tpu_custom_call.1} parent=0
    #allocation2 [shape = 'u8[16384]{0}', space=vmem, size = 0x4000, scoped, tag = 'input window, operand 1, single buffered']
    #allocation3 [shape = 's32[1]{0}', space=sflag, size = 0x4, scoped, tag = 'scoped memory for tpu_custom_call.1']
    #allocation4 [shape = 's32[1]{0}', space=sflag, size = 0x4, scoped, tag = 'scoped memory for tpu_custom_call.1']
    #allocation5 [shape = 'u8[512]{0}', space=vmem, size = 0x400, scoped, tag = 'input window, operand 2, single buffered']
    #allocation6 [shape = 's32[1]{0}', space=sflag, size = 0x4, scoped, tag = 'scoped memory for tpu_custom_call.1']
    #allocation7 [shape = 'u8[32768]{0}', space=vmem, size = 0x8000, scoped, tag = 'input window, operand 3, single buffered']
    #allocation8 [shape = 'u8[4096]{0}', space=vmem, size = 0x1000, scoped, tag = 'output window, operand 0, single buffered']
    %12 = vsyncpa [#allocation3], 0
    %13 = vsyncpa [#allocation6], 0
    %14 = vsyncpa [#allocation4], 0
    // Predicated region
    $region2: #{tpu_custom_call.1} parent=1 // pred_check
      _
    $region3: #{tpu_custom_call.1} parent=1 // pred_check_branch
      %16 = sbr.rel (0) target = $region5
    $region4: #{tpu_custom_call.1} parent=1 // pred_region
      _
    $region5: #{tpu_custom_call.1} parent=1 // pred_fallthru
      _
    // Predicated region
    $region6: #{tpu_custom_call.1} parent=1 // pred_check
      _
    $region7: #{tpu_custom_call.1} parent=1 // pred_check_branch
      %18 = sbr.rel (0) target = $region9
    $region8: #{tpu_custom_call.1} parent=1 // pred_region
      %s20 = ssub.s32 512, 512
      %21 = vsyncadd [#allocation3], %s20
      %s22 = sshll.u32 [#allocation2], 4
      %s23 = int_to_ptr.vmem [resolvable:$true] %s22
      %28 = dma.hbm_to_vmem [thread:$0]  %s1, 512, %s23, [#allocation3], 128, 128, 8
    $region9: #{tpu_custom_call.1} parent=1 // pred_fallthru
      _
    // Predicated region
    $region10: #{tpu_custom_call.1} parent=1 // pred_check
      _
    $region11: #{tpu_custom_call.1} parent=1 // pred_check_branch
      %30 = sbr.rel (0) target = $region13
    $region12: #{tpu_custom_call.1} parent=1 // pred_region
      %s32 = ssub.s32 16, 16
      %33 = vsyncadd [#allocation6], %s32
      %s35 = sshll.u32 [#allocation5], 4
      %s36 = int_to_ptr.vmem [resolvable:$true] %s35
      %38 = dma.hbm_to_vmem [thread:$0]  %s2, 16, %s36, [#allocation6]
    $region13: #{tpu_custom_call.1} parent=1 // pred_fallthru
      _
    // Predicated region
    $region14: #{tpu_custom_call.1} parent=1 // pred_check
      _
    $region15: #{tpu_custom_call.1} parent=1 // pred_check_branch
      %40 = sbr.rel (0) target = $region17
    $region16: #{tpu_custom_call.1} parent=1 // pred_region
      %s42 = ssub.s32 1024, 1024
      %43 = vsyncadd [#allocation6], %s42
      %s44 = sshll.u32 [#allocation7], 4
      %s45 = int_to_ptr.vmem [resolvable:$true] %s44
      %50 = dma.hbm_to_vmem [thread:$0]  %s3, 1024, %s45, [#allocation6], 128, 128, 8
    $region17: #{tpu_custom_call.1} parent=1 // pred_fallthru
      _
    // Predicated region
    $region18: #{tpu_custom_call.1} parent=1 // pred_check
      _
    $region19: #{tpu_custom_call.1} parent=1 // pred_check_branch
      %52 = sbr.rel (0) target = $region21
    $region20: #{tpu_custom_call.1} parent=1 // pred_region
      _
    $region21: #{tpu_custom_call.1} parent=1 // pred_fallthru
      _
    // Predicated region
    $region22: #{tpu_custom_call.1} parent=1 // pred_check
      _
    $region23: #{tpu_custom_call.1} parent=1 // pred_check_branch
      %54 = sbr.rel (0) target = $region25
    $region24: #{tpu_custom_call.1} parent=1 // pred_region
      _
    $region25: #{tpu_custom_call.1} parent=1 // pred_fallthru
      _
    // Predicated region
    $region26: #{tpu_custom_call.1} parent=1 // pred_check
      _
    $region27: #{tpu_custom_call.1} parent=1 // pred_check_branch
      %56 = sbr.rel (0) target = $region29
    $region28: #{tpu_custom_call.1} parent=1 // pred_region
      _
    $region29: #{tpu_custom_call.1} parent=1 // pred_fallthru
      _
    // Predicated region
    $region30: #{tpu_custom_call.1} parent=1 // pred_check
      _
    $region31: #{tpu_custom_call.1} parent=1 // pred_check_branch
      %58 = sbr.rel (0) target = $region33
    $region32: #{tpu_custom_call.1} parent=1 // pred_region
      %59 = dma.done [#allocation3], 512
    $region33: #{tpu_custom_call.1} parent=1 // pred_fallthru
      _
    // Predicated region
    $region34: #{tpu_custom_call.1} parent=1 // pred_check
      _
    $region35: #{tpu_custom_call.1} parent=1 // pred_check_branch
      %61 = sbr.rel (0) target = $region37
    $region36: #{tpu_custom_call.1} parent=1 // pred_region
      %62 = dma.done [#allocation6], 16
    $region37: #{tpu_custom_call.1} parent=1 // pred_fallthru
      _
    // Predicated region
    $region38: #{tpu_custom_call.1} parent=1 // pred_check
      _
    $region39: #{tpu_custom_call.1} parent=1 // pred_check_branch
      %64 = sbr.rel (0) target = $region41
    $region40: #{tpu_custom_call.1} parent=1 // pred_region
      %65 = dma.done [#allocation6], 1024
    $region41: #{tpu_custom_call.1} parent=1 // pred_fallthru
      _
    %v66 = vld [vmem:[%s0] sm:$0xff]
    %v67 = vld [vmem:[#allocation2] sm:$0xff]
    %v68 = vld [vmem:[#allocation2 + $0x8] sm:$0xff]
    %v69 = vld [vmem:[#allocation2 + $0x10] sm:$0xff]
    %v70 = vld [vmem:[#allocation2 + $0x18] sm:$0xff]
    %v71 = vld [vmem:[#allocation5] sm:$0x1]
    %v73 = vlaneseq
    %v74 = vshrl.u32 %v73, 7
    %v75 = vsub.s32 0, %v74
    %v76 = vrot.slane %v71, %v75
    %vm78 = vcmask 261120
    %v80 = vsel %vm78, %v66, 0
    %82 = vmatprep.subr.mxu0 0.0
    %83 = vmatpush1.msra.mxu0 %v67
    %84 = vmatprep.subr.mxu0 0.0
    %85 = vmatpush1.msra.mxu0 %v68
    %86 = vmatprep.subr.mxu0 0.0
    %87 = vmatpush1.msra.mxu0 %v69
    %88 = vmatprep.subr.mxu0 0.0
    %89 = vmatpush1.msra.mxu0 %v70
    %90 = vmatprep.subr.mxu0 0.0
    %91 = vmatpush1.msra.mxu0 0.0
    %92 = vmatprep.subr.mxu0 0.0
    %93 = vmatpush1.msra.mxu0 0.0
    %94 = vmatprep.subr.mxu0 0.0
    %95 = vmatpush1.msra.mxu0 0.0
    %96 = vmatprep.subr.mxu0 0.0
    %97 = vmatpush1.msra.mxu0 0.0
    %98 = vmatprep.subr.mxu0 0.0
    %99 = vmatpush1.msra.mxu0 0.0
    %100 = vmatprep.subr.mxu0 0.0
    %101 = vmatpush1.msra.mxu0 0.0
    %102 = vmatprep.subr.mxu0 0.0
    %103 = vmatpush1.msra.mxu0 0.0
    %104 = vmatprep.subr.mxu0 0.0
    %105 = vmatpush1.msra.mxu0 0.0
    %106 = vmatprep.subr.mxu0 0.0
    %107 = vmatpush1.msra.mxu0 0.0
    %108 = vmatprep.subr.mxu0 0.0
    %109 = vmatpush1.msra.mxu0 0.0
    %110 = vmatprep.subr.mxu0 0.0
    %111 = vmatpush1.msra.mxu0 0.0
    %112 = vmatprep.subr.mxu0 0.0
    %113 = vmatpush1.msra.mxu0 0.0
    %114 = vmatprep.subr.mxu0 0.0
    %115 = vmatpush1.msra.mxu0 0.0
    %116 = vmatprep.subr.mxu0 0.0
    %117 = vmatpush1.msra.mxu0 0.0
    %118 = vmatprep.subr.mxu0 0.0
    %119 = vmatpush1.msra.mxu0 0.0
    %120 = vmatprep.subr.mxu0 0.0
    %121 = vmatpush1.msra.mxu0 0.0
    %122 = vmatprep.subr.mxu0 0.0
    %123 = vmatpush1.msra.mxu0 0.0
    %124 = vmatprep.subr.mxu0 0.0
    %125 = vmatpush1.msra.mxu0 0.0
    %126 = vmatprep.subr.mxu0 0.0
    %127 = vmatpush1.msra.mxu0 0.0
    %128 = vmatprep.subr.mxu0 0.0
    %129 = vmatpush1.msra.mxu0 0.0
    %130 = vmatprep.subr.mxu0 0.0
    %131 = vmatpush1.msra.mxu0 0.0
    %132 = vmatprep.subr.mxu0 0.0
    %133 = vmatpush1.msra.mxu0 0.0
    %134 = vmatprep.subr.mxu0 0.0
    %135 = vmatpush1.msra.mxu0 0.0
    %136 = vmatprep.subr.mxu0 0.0
    %137 = vmatpush1.msra.mxu0 0.0
    %138 = vmatprep.subr.mxu0 0.0
    %139 = vmatpush1.msra.mxu0 0.0
    %140 = vmatprep.subr.mxu0 0.0
    %141 = vmatpush1.msra.mxu0 0.0
    %142 = vmatprep.subr.mxu0 0.0
    %143 = vmatpush1.msra.mxu0 0.0
    %144 = vmatprep.subr.mxu0 0.0
    %145 = vmatpush1.msra.mxu0 0.0
    %146 = vmatprep.mubr.f32.mxu0 0.0
    %147 = vmatmul.mubr.f32.gmra.mrb[0].mxu0 %v80
    %v148 = vpop.f32.mrb[0].mxu0
    %v149 = vadd.f32 %v76, %v148
    %v150 = vpop.f32.mrb[0].mxu0
    %151 = vdwg.mxu0
    %v152 = vmax.f32 %v149, 0.0
    %v153 = vld [vmem:[#allocation7] sm:$0xff]
    %v154 = vld [vmem:[#allocation7 + $0x8] sm:$0xff]
    %v155 = vld [vmem:[#allocation7 + $0x10] sm:$0xff]
    %v156 = vld [vmem:[#allocation7 + $0x18] sm:$0xff]
    %v157 = vld [vmem:[#allocation7 + $0x20] sm:$0xff]
    %v158 = vld [vmem:[#allocation7 + $0x28] sm:$0xff]
    %v159 = vld [vmem:[#allocation7 + $0x30] sm:$0xff]
    %v160 = vld [vmem:[#allocation7 + $0x38] sm:$0xff]
    %v161 = vld [vmem:[%s4] sm:$0x1]
    %v163 = vlaneseq
    %v164 = vshrl.u32 %v163, 7
    %v165 = vsub.s32 0, %v164
    %v166 = vrot.slane %v161, %v165
    %vm168 = vcmask 523264
    %v170 = vsel %vm168, %v152, 0
    %172 = vmatprep.subr.mxu0 0.0
    %173 = vmatpush1.msra.mxu0 %v153
    %174 = vmatprep.subr.mxu0 0.0
    %175 = vmatpush1.msra.mxu0 %v154
    %176 = vmatprep.subr.mxu0 0.0
    %177 = vmatpush1.msra.mxu0 %v155
    %178 = vmatprep.subr.mxu0 0.0
    %179 = vmatpush1.msra.mxu0 %v156
    %180 = vmatprep.subr.mxu0 0.0
    %181 = vmatpush1.msra.mxu0 %v157
    %182 = vmatprep.subr.mxu0 0.0
    %183 = vmatpush1.msra.mxu0 %v158
    %184 = vmatprep.subr.mxu0 0.0
    %185 = vmatpush1.msra.mxu0 %v159
    %186 = vmatprep.subr.mxu0 0.0
    %187 = vmatpush1.msra.mxu0 %v160
    %188 = vmatprep.subr.mxu0 0.0
    %189 = vmatpush1.msra.mxu0 0.0
    %190 = vmatprep.subr.mxu0 0.0
    %191 = vmatpush1.msra.mxu0 0.0
    %192 = vmatprep.subr.mxu0 0.0
    %193 = vmatpush1.msra.mxu0 0.0
    %194 = vmatprep.subr.mxu0 0.0
    %195 = vmatpush1.msra.mxu0 0.0
    %196 = vmatprep.subr.mxu0 0.0
    %197 = vmatpush1.msra.mxu0 0.0
    %198 = vmatprep.subr.mxu0 0.0
    %199 = vmatpush1.msra.mxu0 0.0
    %200 = vmatprep.subr.mxu0 0.0
    %201 = vmatpush1.msra.mxu0 0.0
    %202 = vmatprep.subr.mxu0 0.0
    %203 = vmatpush1.msra.mxu0 0.0
    %204 = vmatprep.subr.mxu0 0.0
    %205 = vmatpush1.msra.mxu0 0.0
    %206 = vmatprep.subr.mxu0 0.0
    %207 = vmatpush1.msra.mxu0 0.0
    %208 = vmatprep.subr.mxu0 0.0
    %209 = vmatpush1.msra.mxu0 0.0
    %210 = vmatprep.subr.mxu0 0.0
    %211 = vmatpush1.msra.mxu0 0.0
    %212 = vmatprep.subr.mxu0 0.0
    %213 = vmatpush1.msra.mxu0 0.0
    %214 = vmatprep.subr.mxu0 0.0
    %215 = vmatpush1.msra.mxu0 0.0
    %216 = vmatprep.subr.mxu0 0.0
    %217 = vmatpush1.msra.mxu0 0.0
    %218 = vmatprep.subr.mxu0 0.0
    %219 = vmatpush1.msra.mxu0 0.0
    %220 = vmatprep.subr.mxu0 0.0
    %221 = vmatpush1.msra.mxu0 0.0
    %222 = vmatprep.subr.mxu0 0.0
    %223 = vmatpush1.msra.mxu0 0.0
    %224 = vmatprep.subr.mxu0 0.0
    %225 = vmatpush1.msra.mxu0 0.0
    %226 = vmatprep.subr.mxu0 0.0
    %227 = vmatpush1.msra.mxu0 0.0
    %228 = vmatprep.subr.mxu0 0.0
    %229 = vmatpush1.msra.mxu0 0.0
    %230 = vmatprep.subr.mxu0 0.0
    %231 = vmatpush1.msra.mxu0 0.0
    %232 = vmatprep.subr.mxu0 0.0
    %233 = vmatpush1.msra.mxu0 0.0
    %234 = vmatprep.subr.mxu0 0.0
    %235 = vmatpush1.msra.mxu0 0.0
    %236 = vmatprep.mubr.f32.mxu0 0.0
    %237 = vmatmul.mubr.f32.gmra.mrb[0].mxu0 %v170
    %v238 = vpop.f32.mrb[0].mxu0
    %v239 = vadd.f32 %v166, %v238
    %v240 = vpop.f32.mrb[0].mxu0
    %241 = vdwg.mxu0
    %v242 = vmax.f32 %v239, 0.0
    %v243 = vld [vmem:[%s5] sm:$0xff]
    %v244 = vld [vmem:[%s6] sm:$0xff]
    %246 = vset.pattern.permute.xlu0 0
    %247 = vperm.xlu0 %246, %v244
    %v248 = vpop.permute.xlu0 %247
    %v251 = vsel %vm168, %v243, 0
    %v254 = vsel %vm168, %v242, 0
    %256 = vmatprep.subr.mxu0 0.0
    %257 = vmatpush1.xpose.msra.mxu0 %v254
    %258 = vmatprep.subr.mxu0 0.0
    %259 = vmatpush1.xpose.msra.mxu0 0.0
    %260 = vmatprep.subr.mxu0 0.0
    %261 = vmatpush1.xpose.msra.mxu0 0.0
    %262 = vmatprep.subr.mxu0 0.0
    %263 = vmatpush1.xpose.msra.mxu0 0.0
    %264 = vmatprep.subr.mxu0 0.0
    %265 = vmatpush1.xpose.msra.mxu0 0.0
    %266 = vmatprep.subr.mxu0 0.0
    %267 = vmatpush1.xpose.msra.mxu0 0.0
    %268 = vmatprep.subr.mxu0 0.0
    %269 = vmatpush1.xpose.msra.mxu0 0.0
    %270 = vmatprep.subr.mxu0 0.0
    %271 = vmatpush1.xpose.msra.mxu0 0.0
    %272 = vmatprep.subr.mxu0 0.0
    %273 = vmatpush1.xpose.msra.mxu0 0.0
    %274 = vmatprep.subr.mxu0 0.0
    %275 = vmatpush1.xpose.msra.mxu0 0.0
    %276 = vmatprep.subr.mxu0 0.0
    %277 = vmatpush1.xpose.msra.mxu0 0.0
    %278 = vmatprep.subr.mxu0 0.0
    %279 = vmatpush1.xpose.msra.mxu0 0.0
    %280 = vmatprep.subr.mxu0 0.0
    %281 = vmatpush1.xpose.msra.mxu0 0.0
    %282 = vmatprep.subr.mxu0 0.0
    %283 = vmatpush1.xpose.msra.mxu0 0.0
    %284 = vmatprep.subr.mxu0 0.0
    %285 = vmatpush1.xpose.msra.mxu0 0.0
    %286 = vmatprep.subr.mxu0 0.0
    %287 = vmatpush1.xpose.msra.mxu0 0.0
    %288 = vmatprep.subr.mxu0 0.0
    %289 = vmatpush1.xpose.msra.mxu0 0.0
    %290 = vmatprep.subr.mxu0 0.0
    %291 = vmatpush1.xpose.msra.mxu0 0.0
    %292 = vmatprep.subr.mxu0 0.0
    %293 = vmatpush1.xpose.msra.mxu0 0.0
    %294 = vmatprep.subr.mxu0 0.0
    %295 = vmatpush1.xpose.msra.mxu0 0.0
    %296 = vmatprep.subr.mxu0 0.0
    %297 = vmatpush1.xpose.msra.mxu0 0.0
    %298 = vmatprep.subr.mxu0 0.0
    %299 = vmatpush1.xpose.msra.mxu0 0.0
    %300 = vmatprep.subr.mxu0 0.0
    %301 = vmatpush1.xpose.msra.mxu0 0.0
    %302 = vmatprep.subr.mxu0 0.0
    %303 = vmatpush1.xpose.msra.mxu0 0.0
    %304 = vmatprep.subr.mxu0 0.0
    %305 = vmatpush1.xpose.msra.mxu0 0.0
    %306 = vmatprep.subr.mxu0 0.0
    %307 = vmatpush1.xpose.msra.mxu0 0.0
    %308 = vmatprep.subr.mxu0 0.0
    %309 = vmatpush1.xpose.msra.mxu0 0.0
    %310 = vmatprep.subr.mxu0 0.0
    %311 = vmatpush1.xpose.msra.mxu0 0.0
    %312 = vmatprep.subr.mxu0 0.0
    %313 = vmatpush1.xpose.msra.mxu0 0.0
    %314 = vmatprep.subr.mxu0 0.0
    %315 = vmatpush1.xpose.msra.mxu0 0.0
    %316 = vmatprep.subr.mxu0 0.0
    %317 = vmatpush1.xpose.msra.mxu0 0.0
    %318 = vmatprep.subr.mxu0 0.0
    %319 = vmatpush1.xpose.msra.mxu0 0.0
    %320 = vmatprep.mubr.f32.mxu0 0.0
    %321 = vmatmul.mubr.f32.gmra.mrb[0].mxu0 %v251
    %v322 = vpop.f32.mrb[0].mxu0
    %v323 = vadd.f32 %v248, %v322
    %v324 = vpop.f32.mrb[0].mxu0
    %325 = vdwg.mxu0
    %vm326 = vcmask 64512
    %327 = vst.msk [vmem:[#allocation8] sm:$0xff] %vm326, %v323
    // Predicated region
    $region42: #{tpu_custom_call.1} parent=1 // pred_check
      _
    $region43: #{tpu_custom_call.1} parent=1 // pred_check_branch
      %329 = sbr.rel (0) target = $region45
    $region44: #{tpu_custom_call.1} parent=1 // pred_region
      %s331 = ssub.s32 128, 128
      %332 = vsyncadd [#allocation4], %s331
      %s334 = sshll.u32 [#allocation8], 4
      %s335 = int_to_ptr.vmem [resolvable:$true] %s334
      %337 = dma.vmem_to_hbm [thread:$0]  %s335, 128, %s7, [#allocation4]
    $region45: #{tpu_custom_call.1} parent=1 // pred_fallthru
      _
    // Predicated region
    $region46: #{tpu_custom_call.1} parent=1 // pred_check
      _
    $region47: #{tpu_custom_call.1} parent=1 // pred_check_branch
      %339 = sbr.rel (0) target = $region49
    $region48: #{tpu_custom_call.1} parent=1 // pred_region
      %340 = dma.done [#allocation4], 128
    $region49: #{tpu_custom_call.1} parent=1 // pred_fallthru
      _
    %341 = vsyncpa [#allocation3], 1
    %342 = vsyncpa [#allocation6], 1
    %343 = vsyncpa [#allocation4], 1

</llo_original>
